<compile_context>
chip_gen: v6e
topology: v6e:2x2x1
jax: 0.10.0
libtpu: 0.0.40
codegen_flags: <defaults>
</compile_context>

<pallas_src>
import functools

import jax
import jax.numpy as jnp
from jax import lax
from jax.experimental import pallas as pl
from jax.experimental.pallas import tpu as pltpu

_EPS = 1e-8  # nn.CosineSimilarity default eps


def _round_up(a, m):
    return ((a + m - 1) // m) * m


def _vmem_capacity_bytes():
    # Trace-time hardware query; fall back to the smallest per-core VMEM (v7x).
    try:
        return int(pltpu.get_tpu_info().vmem_capacity_bytes)
    except Exception:
        return 64 << 20


def _footprint_bytes(tm, tk, kt, itemsize):
    inputs = 2 * 2 * tm * tk * itemsize      # i & j tiles, double-buffered
    acc = tm * tm * 4 if kt > 1 else 0       # VMEM Gram accumulator (multi-K)
    temps = 3 * tm * tm * 4                  # finalize f32 temporaries
    return inputs + acc + temps


def _plan_tiles(B, D, itemsize, budget):
    """Pick (tile_rows, tile_k); prefers a single K tile (tk == padded D)."""
    Bp8 = _round_up(max(B, 1), 8)
    Dp = _round_up(max(D, 1), 128)

    # Preferred: full feature dim per step (Kt == 1) so consecutive pairs that
    # share the i row-tile skip its DMA entirely, with the largest row tile
    # that fits this generation's VMEM budget.
    for cap in (2048, 1024, 512, 256, 128):
        tm = min(cap, Bp8)
        if _footprint_bytes(tm, Dp, 1, itemsize) <= budget:
            return tm, Dp
    # Very large D: split the feature axis and accumulate in VMEM scratch.
    for tm_cap in (1024, 512, 256, 128, 64, 32, 16, 8):
        tm = min(tm_cap, Bp8)
        for tk_cap in (2048, 1024, 512, 256, 128):
            tk = min(tk_cap, Dp)
            kt = -(-Dp // tk)
            if _footprint_bytes(tm, tk, kt, itemsize) <= budget:
                return tm, tk
    return 8, 128


def _gram_tile(xi, xj, j_transposed):
    if j_transposed:
        # xj is the pre-transposed (tk, tm) tile: plain (M,K)@(K,N) on the MXU.
        return jnp.dot(xi, xj, preferred_element_type=jnp.float32)
    # xj is (tm, tk): A @ B^T (contract dim 1 of both) — same form as the
    # production TPU flash-attention kernels.
    return lax.dot_general(xi, xj, dimension_numbers=(((1,), (1,)), ((), ())),
                           preferred_element_type=jnp.float32)


def _tile_loss(gram, ni, nj, ti, tj):
    """Weighted sum of squared off-diagonal cosines for one (ti, tj) tile pair."""
    tm, tn = gram.shape
    # PyTorch cosine_similarity clamps the *product* of the norms:
    #   cos = <a, b> / max(||a|| * ||b||, eps)
    d2 = jnp.maximum(ni * nj, jnp.float32(_EPS * _EPS))      # (tm, tn)
    cos = gram * lax.rsqrt(d2)                               # rsqrt -> EUP
    cos2 = cos * cos
    # Drop true diagonal entries (global row == global col) analytically; this
    # replaces the "- B" of the reference formula and makes zero-padded rows a
    # no-op (their cos is exactly 0).
    row = lax.broadcasted_iota(jnp.int32, (tm, tn), 0) + ti * tm
    col = lax.broadcasted_iota(jnp.int32, (tm, tn), 1) + tj * tn
    cos2 = jnp.where(row == col, jnp.float32(0.0), cos2)
    # Off-diagonal tile pairs stand in for both (i, j) and (j, i).
    w = jnp.where(ti == tj, jnp.float32(1.0), jnp.float32(2.0))
    return jnp.sum(cos2) * w


def _simc_kernel_fullk(ti_ref, tj_ref, xi_ref, xj_ref, ni_ref, nj_ref, out_ref,
                       *, j_transposed):
    """Single K tile per pair: Gram product stays in registers (no acc scratch)."""
    p = pl.program_id(0)
    gram = _gram_tile(xi_ref[...], xj_ref[...], j_transposed)
    s = _tile_loss(gram, ni_ref[...], nj_ref[...], ti_ref[p], tj_ref[p])
    out_ref[...] = jnp.broadcast_to(s, out_ref.shape)


def _simc_kernel_multik(ti_ref, tj_ref, xi_ref, xj_ref, ni_ref, nj_ref, out_ref,
                        acc_ref, *, j_transposed):
    """Feature axis split into K tiles; Gram accumulated in VMEM scratch."""
    p = pl.program_id(0)
    k = pl.program_id(1)
    nk = pl.num_programs(1)

    @pl.when(k == 0)
    def _init():
        acc_ref[...] = jnp.zeros_like(acc_ref)

    acc_ref[...] += _gram_tile(xi_ref[...], xj_ref[...], j_transposed)

    @pl.when(k == nk - 1)
    def _finalize():
        s = _tile_loss(acc_ref[...], ni_ref[...], nj_ref[...],
                       ti_ref[p], tj_ref[p])
        out_ref[...] = jnp.broadcast_to(s, out_ref.shape)


def simc_loss(x, *, tile_rows=None, tile_k=None, matmul_dtype=jnp.bfloat16):
    """SIMcLoss forward. x: (B, D). Returns scalar float32 loss.

    As in the PyTorch module, B must be >= 2 (B**2 - B == 0 otherwise).
    """
    B, D = x.shape
    mm_dtype = jnp.dtype(matmul_dtype)
    itemsize = mm_dtype.itemsize

    vmem_cap = _vmem_capacity_bytes()
    plan_budget = vmem_cap // 2          # headroom for pipelining / compiler

    if tile_rows is None and tile_k is None:
        tm, tk = _plan_tiles(B, D, itemsize, plan_budget)
    else:
        tm = (_round_up(tile_rows, 8) if tile_rows is not None
              else min(512, _round_up(B, 8)))
        tk = (_round_up(tile_k, 128) if tile_k is not None
              else _round_up(D, 128))

    Bp = _round_up(B, tm)
    Dp = _round_up(D, tk)
    T = Bp // tm
    Kt = Dp // tk

    # Pre-transposed j operand only when its (tk, tm) tile is lane-legal
    # (always true for planner-chosen tiles); otherwise A @ B^T on xb.
    j_transposed = (tm % 128 == 0) or (tm == Bp)

    # Cast to the MXU dtype once in the wrapper (halves input HBM traffic vs
    # streaming f32).  Zero padding is exact: padded columns change neither
    # dot products nor norms; padded rows give cos == 0 everywhere.
    xb = jnp.pad(x, ((0, Bp - B), (0, Dp - D))).astype(mm_dtype)      # (Bp, Dp)

    # Per-row squared norms, computed once in f32 (no per-step norm matmuls).
    xf = x.astype(jnp.float32)
    n2 = jnp.pad(jnp.sum(xf * xf, axis=1), (0, Bp - B))               # (Bp,)
    ni_all = n2.reshape(T, tm, 1)      # sublane view, indexed by ti[p]
    nj_all = n2.reshape(T, 1, tm)      # lane view, indexed by tj[p]

    # Upper-triangle tile pairs (cosine matrix is symmetric), ordered i-outer
    # so consecutive pairs share the i tile (DMA skipped when Kt == 1).
    # Diagonal pairs still DMA the same block into both buffers; acceptable
    # for large T (could be split into a one-input call for small T).
    pairs = [(i, j) for i in range(T) for j in range(i, T)]
    P = len(pairs)
    ti_arr = jnp.asarray([i for i, _ in pairs], dtype=jnp.int32)
    tj_arr = jnp.asarray([j for _, j in pairs], dtype=jnp.int32)

    if Kt == 1:
        kernel = functools.partial(_simc_kernel_fullk, j_transposed=j_transposed)
        grid = (P,)
        dims = ("parallel",)
        xi_spec = pl.BlockSpec((tm, Dp), lambda p, ti, tj: (ti[p], 0))
        if j_transposed:
            xj_in = xb.T                                              # (Dp, Bp)
            xj_spec = pl.BlockSpec((Dp, tm), lambda p, ti, tj: (0, tj[p]))
        else:
            xj_in = xb
            xj_spec = pl.BlockSpec((tm, Dp), lambda p, ti, tj: (tj[p], 0))
        ni_spec = pl.BlockSpec((None, tm, 1), lambda p, ti, tj: (ti[p], 0, 0))
        nj_spec = pl.BlockSpec((None, 1, tm), lambda p, ti, tj: (tj[p], 0, 0))
        out_spec = pl.BlockSpec((1, 8, 128), lambda p, ti, tj: (p, 0, 0))
        scratch = []
    else:
        kernel = functools.partial(_simc_kernel_multik, j_transposed=j_transposed)
        grid = (P, Kt)
        dims = ("parallel", "arbitrary")
        xi_spec = pl.BlockSpec((tm, tk), lambda p, k, ti, tj: (ti[p], k))
        if j_transposed:
            xj_in = xb.T
            xj_spec = pl.BlockSpec((tk, tm), lambda p, k, ti, tj: (k, tj[p]))
        else:
            xj_in = xb
            xj_spec = pl.BlockSpec((tm, tk), lambda p, k, ti, tj: (tj[p], k))
        ni_spec = pl.BlockSpec((None, tm, 1), lambda p, k, ti, tj: (ti[p], 0, 0))
        nj_spec = pl.BlockSpec((None, 1, tm), lambda p, k, ti, tj: (tj[p], 0, 0))
        out_spec = pl.BlockSpec((1, 8, 128), lambda p, k, ti, tj: (p, 0, 0))
        scratch = [pltpu.VMEM((tm, tm), jnp.float32)]

    # Only raise the scoped-VMEM limit when the plan actually needs it.
    need = _footprint_bytes(tm, tk, Kt, itemsize)
    cp_kwargs = dict(dimension_semantics=dims)
    if need > (16 << 20):
        cp_kwargs["vmem_limit_bytes"] = int(
            min(max(need * 3 // 2, 32 << 20), (vmem_cap * 3) // 4))

    cost = pl.CostEstimate(
        flops=2 * P * tm * tm * Dp,
        transcendentals=P * tm * tm,
        bytes_accessed=P * 2 * tm * Dp * itemsize + P * 8 * 128 * 4,
    )

    partials = pl.pallas_call(
        kernel,
        grid_spec=pltpu.PrefetchScalarGridSpec(
            num_scalar_prefetch=2,
            grid=grid,
            in_specs=[xi_spec, xj_spec, ni_spec, nj_spec],
            out_specs=out_spec,
            scratch_shapes=scratch),
        out_shape=jax.ShapeDtypeStruct((P, 8, 128), jnp.float32),
        compiler_params=pltpu.CompilerParams(**cp_kwargs),
        cost_estimate=cost,
    )(ti_arr, tj_arr, xb, xj_in, ni_all, nj_all)

    off_diag_sq_sum = jnp.sum(partials[:, 0, 0])
    return off_diag_sq_sum / jnp.float32(B * B - B)


def _reference(x, eps=_EPS):
    """Pure-JAX reference mirroring the PyTorch forward (product-clamped eps)."""
    xf = x.astype(jnp.float32)
    B = xf.shape[0]
    g = jnp.sum(xf[:, None, :] * xf[None, :, :], axis=-1)       # (B, B)
    n2 = jnp.sum(xf * xf, axis=1)
    denom = jnp.sqrt(jnp.maximum(n2[:, None] * n2[None, :], eps * eps))
    cos = g / denom
    return (jnp.sum(jnp.square(cos)) - B) / (B * B - B)


if __name__ == "__main__":
    key = jax.random.PRNGKey(0)
    k1, k2, k3 = jax.random.split(key, 3)

    # Small deterministic inputs consistent with the module's (B, D) forward.
    x1 = jax.random.normal(k1, (8, 32), dtype=jnp.float32)     # 1 pair, 1 K tile
    x2 = jax.random.normal(k2, (24, 160), dtype=jnp.float32)   # forced tiny tiles
    x3 = jax.random.normal(k3, (160, 96), dtype=jnp.float32)   # 2 row tiles of 128

    cases = [
        ("demo-bf16", x1, {}),                                  # full-K, transposed j
        ("demo-f32 ", x1, {"matmul_dtype": jnp.float32}),       # opt-in f32 MXU path
        ("tiled-mk ", x2, {"tile_rows": 8, "tile_k": 128}),     # multi-K accumulator
        ("tiled-fk ", x2, {"tile_rows": 8}),                    # full-K, 6 pairs
        ("tiled-tr ", x3, {"tile_rows": 128}),                  # full-K, transposed j, 3 pairs
    ]
    for name, x, kw in cases:
        got = jax.block_until_ready(simc_loss(x, **kw))
        ref = jax.block_until_ready(_reference(x))
        assert jnp.isfinite(got), f"{name}: loss is not finite ({got})"
        # bf16 MXU operands with f32 accumulation -> few-percent tolerance.
        tol = 5e-3 + 5e-2 * abs(float(ref))
        assert abs(float(got) - float(ref)) < tol, f"{name}: {got} vs {ref}"

    print("KERNEL_OK")
</pallas_src>

<mosaic_0001>
module attributes {stable_mosaic.version = 11 : i64} {
  func.func @_simc_kernel_fullk(%arg0: i32, %arg1: memref<1xi32, #tpu.memory_space<smem>>, %arg2: memref<1xi32, #tpu.memory_space<smem>>, %arg3: memref<8x128xbf16, #tpu.memory_space<vmem>>, %arg4: memref<128x8xbf16, #tpu.memory_space<vmem>>, %arg5: memref<1x8x1xf32, #tpu.memory_space<vmem>>, %arg6: memref<1x1x8xf32, #tpu.memory_space<vmem>>, %arg7: memref<1x8x128xf32, #tpu.memory_space<vmem>>) attributes {dimension_semantics = [#tpu.dimension_semantics<parallel>], iteration_bounds = array<i64: 1>, scalar_prefetch = 2 : i64, scratch_operands = 0 : i64, tpu.core_type = #tpu.core_type<tc>, window_params = [{transform_indices = @transform_0, window_bounds = array<i64: 8, 128>}, {transform_indices = @transform_1, window_bounds = array<i64: 128, 8>}, {transform_indices = @transform_2, window_bounds = array<i64: 1, 8, 1>}, {transform_indices = @transform_3, window_bounds = array<i64: 1, 1, 8>}, {transform_indices = @transform_4, window_bounds = array<i64: 1, 8, 128>}]} {
    %c0 = arith.constant 0 : index
    %c0_0 = arith.constant 0 : index
    %0 = vector.load %arg3[%c0, %c0_0] : memref<8x128xbf16, #tpu.memory_space<vmem>>, vector<8x128xbf16>
    %c0_1 = arith.constant 0 : index
    %c0_2 = arith.constant 0 : index
    %1 = vector.load %arg4[%c0_1, %c0_2] : memref<128x8xbf16, #tpu.memory_space<vmem>>, vector<128x8xbf16>
    %cst = arith.constant dense<0.000000e+00> : vector<8x8xf32>
    %2 = tpu.matmul %0, %1, %cst {dimension_numbers = #tpu.dot_dimension_numbers<[1], [0], [0], [1], [0, 0, 1, 1], [], []>} : vector<8x128xbf16>, vector<128x8xbf16>, vector<8x8xf32> -> vector<8x8xf32>
    %c0_3 = arith.constant 0 : index
    %c0_4 = arith.constant 0 : index
    %c0_5 = arith.constant 0 : index
    %3 = vector.load %arg5[%c0_3, %c0_4, %c0_5] : memref<1x8x1xf32, #tpu.memory_space<vmem>>, vector<1x8x1xf32>
    %4 = vector.shape_cast %3 : vector<1x8x1xf32> to vector<8x1xf32>
    %c0_6 = arith.constant 0 : index
    %c0_7 = arith.constant 0 : index
    %c0_8 = arith.constant 0 : index
    %5 = vector.load %arg6[%c0_6, %c0_7, %c0_8] : memref<1x1x8xf32, #tpu.memory_space<vmem>>, vector<1x1x8xf32>
    %6 = vector.shape_cast %5 : vector<1x1x8xf32> to vector<1x8xf32>
    %7 = arith.index_cast %arg0 : i32 to index
    %8 = memref.load %arg1[%7] : memref<1xi32, #tpu.memory_space<smem>>
    %9 = arith.index_cast %arg0 : i32 to index
    %10 = memref.load %arg2[%9] : memref<1xi32, #tpu.memory_space<smem>>
    %11 = vector.broadcast %4 : vector<8x1xf32> to vector<8x8xf32>
    %12 = vector.broadcast %6 : vector<1x8xf32> to vector<8x8xf32>
    %13 = arith.mulf %11, %12 : vector<8x8xf32>
    %cst_9 = arith.constant 1.000000e-16 : f32
    %14 = vector.broadcast %cst_9 : f32 to vector<8x8xf32>
    %15 = arith.maximumf %13, %14 : vector<8x8xf32>
    %16 = math.rsqrt %15 : vector<8x8xf32>
    %17 = arith.mulf %2, %16 : vector<8x8xf32>
    %18 = arith.mulf %17, %17 : vector<8x8xf32>
    %19 = tpu.iota {dimensions = array<i32: 0>} : vector<8x8xi32>
    %c8_i32 = arith.constant 8 : i32
    %20 = arith.muli %8, %c8_i32 : i32
    %21 = vector.broadcast %20 : i32 to vector<8x8xi32>
    %22 = arith.addi %19, %21 : vector<8x8xi32>
    %23 = tpu.iota {dimensions = array<i32: 1>} : vector<8x8xi32>
    %c8_i32_10 = arith.constant 8 : i32
    %24 = arith.muli %10, %c8_i32_10 : i32
    %25 = vector.broadcast %24 : i32 to vector<8x8xi32>
    %26 = arith.addi %23, %25 : vector<8x8xi32>
    %27 = arith.cmpi eq, %22, %26 : vector<8x8xi32>
    %cst_11 = arith.constant 0.000000e+00 : f32
    %28 = vector.broadcast %cst_11 : f32 to vector<8x8xf32>
    %29 = arith.select %27, %28, %18 : vector<8x8xi1>, vector<8x8xf32>
    %30 = arith.cmpi eq, %8, %10 : i32
    %cst_12 = arith.constant 1.000000e+00 : f32
    %cst_13 = arith.constant 2.000000e+00 : f32
    %31 = arith.select %30, %cst_12, %cst_13 : f32
    %32 = vector.shape_cast %29 : vector<8x8xf32> to vector<1x8x8xf32>
    %cst_14 = arith.constant dense<0.000000e+00> : vector<1xf32>
    %33 = vector.multi_reduction <add>, %32, %cst_14 [1, 2] : vector<1x8x8xf32> to vector<1xf32>
    %34 = vector.shape_cast %33 : vector<1xf32> to vector<1x1x1xf32>
    %35 = vector.extract %34[0, 0, 0] : f32 from vector<1x1x1xf32>
    %36 = arith.mulf %35, %31 : f32
    %37 = vector.broadcast %36 : f32 to vector<1x8x128xf32>
    %c0_15 = arith.constant 0 : index
    %c0_16 = arith.constant 0 : index
    %c0_17 = arith.constant 0 : index
    %38 = vector.load %arg7[%c0_15, %c0_16, %c0_17] : memref<1x8x128xf32, #tpu.memory_space<vmem>>, vector<1x8x128xf32>
    tpu.vector_store %arg7[%c0_15, %c0_16, %c0_17], %37 {strides = array<i32>} : memref<1x8x128xf32, #tpu.memory_space<vmem>>, vector<1x8x128xf32>,
    return
  }
  func.func @transform_0(%arg0: i32, %arg1: memref<1xi32, #tpu.memory_space<smem>>, %arg2: memref<1xi32, #tpu.memory_space<smem>>) -> (i32, i32) {
    %0 = arith.index_cast %arg0 : i32 to index
    %1 = memref.load %arg1[%0] : memref<1xi32, #tpu.memory_space<smem>>
    %c0_i32 = arith.constant 0 : i32
    %c0_i32_0 = arith.constant 0 : i32
    return %1, %c0_i32 : i32, i32
  }
  func.func @transform_1(%arg0: i32, %arg1: memref<1xi32, #tpu.memory_space<smem>>, %arg2: memref<1xi32, #tpu.memory_space<smem>>) -> (i32, i32) {
    %0 = arith.index_cast %arg0 : i32 to index
    %1 = memref.load %arg2[%0] : memref<1xi32, #tpu.memory_space<smem>>
    %c0_i32 = arith.constant 0 : i32
    %c0_i32_0 = arith.constant 0 : i32
    return %c0_i32, %1 : i32, i32
  }
  func.func @transform_2(%arg0: i32, %arg1: memref<1xi32, #tpu.memory_space<smem>>, %arg2: memref<1xi32, #tpu.memory_space<smem>>) -> (i32, i32, i32) {
    %0 = arith.index_cast %arg0 : i32 to index
    %1 = memref.load %arg1[%0] : memref<1xi32, #tpu.memory_space<smem>>
    %c0_i32 = arith.constant 0 : i32
    %c0_i32_0 = arith.constant 0 : i32
    %c0_i32_1 = arith.constant 0 : i32
    return %1, %c0_i32, %c0_i32_0 : i32, i32, i32
  }
  func.func @transform_3(%arg0: i32, %arg1: memref<1xi32, #tpu.memory_space<smem>>, %arg2: memref<1xi32, #tpu.memory_space<smem>>) -> (i32, i32, i32) {
    %0 = arith.index_cast %arg0 : i32 to index
    %1 = memref.load %arg2[%0] : memref<1xi32, #tpu.memory_space<smem>>
    %c0_i32 = arith.constant 0 : i32
    %c0_i32_0 = arith.constant 0 : i32
    %c0_i32_1 = arith.constant 0 : i32
    return %1, %c0_i32, %c0_i32_0 : i32, i32, i32
  }
  func.func @transform_4(%arg0: i32, %arg1: memref<1xi32, #tpu.memory_space<smem>>, %arg2: memref<1xi32, #tpu.memory_space<smem>>) -> (i32, i32, i32) {
    %c0_i32 = arith.constant 0 : i32
    %c0_i32_0 = arith.constant 0 : i32
    %c0_i32_1 = arith.constant 0 : i32
    return %arg0, %c0_i32, %c0_i32_0 : i32, i32, i32
  }
}

</mosaic_0001>

<llo_original>
// kernel: tpu_custom_call.1
$region0: #{tpu_custom_call.1}
  #allocation0 [shape = 'u32[]', space=smem, size = 0x4, offset = 0x4, fixed_abs, tag = 'smem constant byte address 0x4 - core index']
  #allocation1 [shape = 'u32[144,128]{1,0:T(1,128)}', space=vmem, size = 0x12000, scoped, tag = 'internal scratch']
  #allocation2 [shape = 's32[1]{0}', space=sflag, size = 0x4, scoped, tag = 'scoped memory for tpu_custom_call.1']
  #allocation3 [shape = 's32[1]{0:T(128)S(6)}', space=smem, size = 0x200, scoped, tag = 'prefetched SMEM operand 0']
  #allocation4 [shape = 's32[1]{0:T(128)S(6)}', space=smem, size = 0x200, scoped, tag = 'prefetched SMEM operand 1']
  %s0 = inlined_call_operand.<no memory space> [shape: s32[1], index: 0, kind: input, shape index: {}]
  %s1 = inlined_call_operand.<no memory space> [shape: s32[1], index: 1, kind: input, shape index: {}]
  %s2 = inlined_call_operand.vmem [shape: bf16[8,128], index: 2, kind: input, shape index: {}]
  %s3 = inlined_call_operand.vmem [shape: bf16[128,8], index: 3, kind: input, shape index: {}]
  %s4 = inlined_call_operand.vmem [shape: f32[1,8,1], index: 4, kind: input, shape index: {}]
  %s5 = inlined_call_operand.vmem [shape: f32[1,1,8], index: 5, kind: input, shape index: {}]
  %s6 = inlined_call_operand.hbm [shape: f32[1,8,128], index: 6, kind: output, shape index: {}]
  %s7 = sld [smem:[#allocation0]]
  $region26: #{tpu_custom_call.1} parent=0
    _
  %s9 = ssub.s32 1, %s7
  %s10 = scalar_select 0, %s9, %s7
  %11 = sst [smem:[#allocation3]] %s0
  %12 = sst [smem:[#allocation4]] %s1
  $region1: #{tpu_custom_call.1} parent=0
    #allocation5 [shape = 'u8[4096]{0}', space=vmem, size = 0x1000, scoped, tag = 'output window, operand 0, single buffered']
    #allocation6 [shape = 's32[1]{0}', space=sflag, size = 0x4, scoped, tag = 'scoped memory for tpu_custom_call.1']
    %13 = vsyncpa [#allocation6], 0
    // Predicated region
    $region2: #{tpu_custom_call.1} parent=1 // pred_check
      _
    $region3: #{tpu_custom_call.1} parent=1 // pred_check_branch
      %15 = sbr.rel (0) target = $region5
    $region4: #{tpu_custom_call.1} parent=1 // pred_region
      %s16 = sld [smem:[#allocation3]]
      %p17 = scmp.lt.s32.totalorder %s16, 0
      %s18 = scalar_select %p17, %s16, 0
      %s19 = smul.addr %s18, 4
      %s20 = scalar_lea.vmem %s2, %s19
      %s21 = sld [smem:[#allocation3]]
    $region5: #{tpu_custom_call.1} parent=1 // pred_fallthru
      _
    // Predicated region
    $region6: #{tpu_custom_call.1} parent=1 // pred_check
      _
    $region7: #{tpu_custom_call.1} parent=1 // pred_check_branch
      %23 = sbr.rel (0) target = $region9
    $region8: #{tpu_custom_call.1} parent=1 // pred_region
      %s24 = sld [smem:[#allocation4]]
      %p25 = scmp.lt.s32.totalorder %s24, 0
      %s26 = scalar_select %p25, %s24, 0
      %s27 = smul.addr %s26, 4
      %s28 = scalar_lea.vmem %s3, %s27
      %s29 = sld [smem:[#allocation4]]
    $region9: #{tpu_custom_call.1} parent=1 // pred_fallthru
      _
    // Predicated region
    $region10: #{tpu_custom_call.1} parent=1 // pred_check
      _
    $region11: #{tpu_custom_call.1} parent=1 // pred_check_branch
      %31 = sbr.rel (0) target = $region13
    $region12: #{tpu_custom_call.1} parent=1 // pred_region
      %s32 = sld [smem:[#allocation3]]
      %p33 = scmp.lt.s32.totalorder %s32, 0
      %s34 = scalar_select %p33, %s32, 0
      %s35 = smul.addr %s34, 8
      %s36 = scalar_lea.vmem %s4, %s35
      %s37 = sld [smem:[#allocation3]]
    $region13: #{tpu_custom_call.1} parent=1 // pred_fallthru
      _
    // Predicated region
    $region14: #{tpu_custom_call.1} parent=1 // pred_check
      _
    $region15: #{tpu_custom_call.1} parent=1 // pred_check_branch
      %39 = sbr.rel (0) target = $region17
    $region16: #{tpu_custom_call.1} parent=1 // pred_region
      %s40 = sld [smem:[#allocation4]]
      %p41 = scmp.lt.s32.totalorder %s40, 0
      %s42 = scalar_select %p41, %s40, 0
      %s43 = scalar_lea.vmem %s5, %s42
      %s44 = sld [smem:[#allocation4]]
    $region17: #{tpu_custom_call.1} parent=1 // pred_fallthru
      _
    %s45 = sld [smem:[#allocation3]]
    %p46 = scmp.lt.s32.totalorder %s45, 0
    %s47 = scalar_select %p46, %s45, 0
    %s48 = smul.addr %s47, 4
    %s49 = scalar_lea.vmem %s2, %s48
    %s50 = sld [smem:[#allocation4]]
    %p51 = scmp.lt.s32.totalorder %s50, 0
    %s52 = scalar_select %p51, %s50, 0
    %s53 = smul.addr %s52, 4
    %s54 = scalar_lea.vmem %s3, %s53
    %s55 = sld [smem:[#allocation3]]
    %p56 = scmp.lt.s32.totalorder %s55, 0
    %s57 = scalar_select %p56, %s55, 0
    %s58 = smul.addr %s57, 8
    %s59 = scalar_lea.vmem %s4, %s58
    %s60 = sld [smem:[#allocation4]]
    %p61 = scmp.lt.s32.totalorder %s60, 0
    %s62 = scalar_select %p61, %s60, 0
    %s63 = scalar_lea.vmem %s5, %s62
    %s64 = sld [smem:[#allocation3]]
    %p65 = scmp.lt.s32.totalorder %s64, 0
    %s66 = scalar_select %p65, %s64, 0
    %s67 = smul.addr %s66, 4
    %s68 = scalar_lea.vmem %s2, %s67
    %s69 = sld [smem:[#allocation3]]
    %s70 = sld [smem:[#allocation4]]
    %p71 = scmp.lt.s32.totalorder %s70, 0
    %s72 = scalar_select %p71, %s70, 0
    %s73 = smul.addr %s72, 4
    %s74 = scalar_lea.vmem %s3, %s73
    %s75 = sld [smem:[#allocation4]]
    %s76 = sld [smem:[#allocation3]]
    %p77 = scmp.lt.s32.totalorder %s76, 0
    %s78 = scalar_select %p77, %s76, 0
    %s79 = smul.addr %s78, 8
    %s80 = scalar_lea.vmem %s4, %s79
    %s81 = sld [smem:[#allocation3]]
    %s82 = sld [smem:[#allocation4]]
    %p83 = scmp.lt.s32.totalorder %s82, 0
    %s84 = scalar_select %p83, %s82, 0
    %s85 = scalar_lea.vmem %s5, %s84
    %s86 = sld [smem:[#allocation4]]
    %v88 = vld [vmem:[%s68] sm:$0xf]
    %v89 = vld [vmem:[%s74] sm:$0xf]
    %v90 = vld [vmem:[%s74 + $0x4] sm:$0xf]
    %v91 = vld [vmem:[%s74 + $0x8] sm:$0xf]
    %v92 = vld [vmem:[%s74 + $0xc] sm:$0xf]
    %v93 = vld [vmem:[%s74 + $0x10] sm:$0xf]
    %v94 = vld [vmem:[%s74 + $0x14] sm:$0xf]
    %v95 = vld [vmem:[%s74 + $0x18] sm:$0xf]
    %v96 = vld [vmem:[%s74 + $0x1c] sm:$0xf]
    %v97 = vld [vmem:[%s74 + $0x20] sm:$0xf]
    %v98 = vld [vmem:[%s74 + $0x24] sm:$0xf]
    %v99 = vld [vmem:[%s74 + $0x28] sm:$0xf]
    %v100 = vld [vmem:[%s74 + $0x2c] sm:$0xf]
    %v101 = vld [vmem:[%s74 + $0x30] sm:$0xf]
    %v102 = vld [vmem:[%s74 + $0x34] sm:$0xf]
    %v103 = vld [vmem:[%s74 + $0x38] sm:$0xf]
    %v104 = vld [vmem:[%s74 + $0x3c] sm:$0xf]
    %v121 = vunpack.c.l.b16 %v89
    %v122 = vunpack.c.l.b16 %v90
    %v123 = vunpack.c.l.b16 %v91
    %v124 = vunpack.c.l.b16 %v92
    %v125 = vunpack.c.l.b16 %v93
    %v126 = vunpack.c.l.b16 %v94
    %v127 = vunpack.c.l.b16 %v95
    %v128 = vunpack.c.l.b16 %v96
    %v129 = vunpack.c.l.b16 %v97
    %v130 = vunpack.c.l.b16 %v98
    %v131 = vunpack.c.l.b16 %v99
    %v132 = vunpack.c.l.b16 %v100
    %v133 = vunpack.c.l.b16 %v101
    %v134 = vunpack.c.l.b16 %v102
    %v135 = vunpack.c.l.b16 %v103
    %v136 = vunpack.c.l.b16 %v104
    %v137 = vpack.c.b16 %v122, %v121
    %v138 = vpack.c.b16 %v124, %v123
    %v139 = vpack.c.b16 %v126, %v125
    %v140 = vpack.c.b16 %v128, %v127
    %v141 = vpack.c.b16 %v130, %v129
    %v142 = vpack.c.b16 %v132, %v131
    %v143 = vpack.c.b16 %v134, %v133
    %v144 = vpack.c.b16 %v136, %v135
    %153 = vmatprep.subr.bf16.mxu0 0
    %154 = vmatpush1.bf16.msra.mxu0 %v144
    %155 = vmatprep.subr.bf16.mxu0 0
    %156 = vmatpush1.bf16.msra.mxu0 %v143
    %157 = vmatprep.subr.bf16.mxu0 0
    %158 = vmatpush1.bf16.msra.mxu0 %v142
    %159 = vmatprep.subr.bf16.mxu0 0
    %160 = vmatpush1.bf16.msra.mxu0 %v141
    %161 = vmatprep.subr.bf16.mxu0 0
    %162 = vmatpush1.bf16.msra.mxu0 %v140
    %163 = vmatprep.subr.bf16.mxu0 0
    %164 = vmatpush1.bf16.msra.mxu0 %v139
    %165 = vmatprep.subr.bf16.mxu0 0
    %166 = vmatpush1.bf16.msra.mxu0 %v138
    %167 = vmatprep.subr.bf16.mxu0 0
    %168 = vmatpush1.bf16.msra.mxu0 %v137
    %169 = vmatprep.subr.bf16.mxu0 0
    %170 = vmatpush2.bf16.msra.mxu0 0
    %171 = vmatprep.subr.bf16.mxu0 0
    %172 = vmatpush2.bf16.msra.mxu0 0
    %173 = vmatprep.subr.bf16.mxu0 0
    %174 = vmatpush2.bf16.msra.mxu0 0
    %175 = vmatprep.subr.bf16.mxu0 0
    %176 = vmatpush2.bf16.msra.mxu0 0
    %177 = vmatprep.subr.bf16.mxu0 0
    %178 = vmatpush2.bf16.msra.mxu0 0
    %179 = vmatprep.subr.bf16.mxu0 0
    %180 = vmatpush2.bf16.msra.mxu0 0
    %181 = vmatprep.subr.bf16.mxu0 0
    %182 = vmatpush2.bf16.msra.mxu0 0
    %183 = vmatprep.subr.bf16.mxu0 0
    %184 = vmatpush2.bf16.msra.mxu0 0
    %185 = vmatprep.mubr.bf16.mxu0 0
    %186 = vmatmul.mubr.bf16.gmra.mxu0 %v88
    %v187 = vpop.f32.mrf.mxu0
    %v188 = vadd.f32 0.0, %v187
    %v189 = vpop.f32.mrf.mxu0
    %v190 = vpop.f32.mrf.mxu0
    %v191 = vpop.f32.mrf.mxu0
    %192 = vdwg.mxu0
    %v193 = vld [vmem:[%s80] sm:$0xff]
    %v194 = vld [vmem:[%s85] sm:$0x1]
    %s195 = sld [smem:[#allocation3]]
    %s196 = sld [smem:[#allocation4]]
    %198 = vset.pattern.permute.xlu0 0
    %199 = vperm.xlu0 %198, %v193
    %v200 = vpop.permute.xlu0 %199
    %v203 = vlaneseq
    %v204 = vshrl.u32 %v203, 7
    %v205 = vsub.s32 0, %v204
    %v206 = vrot.slane %v194, %v205
    %v208 = vmul.f32 %v200, %v206
    %v209 = vmax.f32 %v208, 1e-16
    %v210 = vrsqrt.pop %v209
    %v211 = vmul.f32 %v188, %v210
    %v212 = vmul.f32 %v211, %v211
    %v213 = vlaneseq
    %v214 = vshrl.u32 %v213, 7
    %s215 = smul.u32 %s195, 8
    %v216 = vstv %s215
    %v217 = vadd.s32 %v214, %v216
    %v218 = vlaneseq
    %v219 = vand.u32 %v218, 127
    %s220 = smul.u32 %s196, 8
    %v221 = vstv %s220
    %v222 = vadd.s32 %v219, %v221
    %vm223 = vcmp.eq.s32.totalorder %v217, %v222
    %v224 = vsel %vm223, 0.0, %v212
    %p225 = scmp.eq.s32.totalorder %s195, %s196
    %s226 = scalar_select %p225, 1.0, 2.0
    %vm227 = vcmask 64512
    %v228 = vsel %vm227, %v224, 0.0
    %229 = vadd.xlane.f32.xlu0 %v228
    %v230 = vpop.xlane.xlu0 %229
    %v231 = vrot.slane %v230, 4
    %v232 = vadd.f32 %v230, %v231
    %v233 = vrot.slane %v232, 2
    %v234 = vadd.f32 %v232, %v233
    %v235 = vrot.slane %v234, 1
    %v236 = vadd.f32 %v234, %v235
    %s237 = vtos %v236
    %s238 = smul.f32 %s237, %s226
    %v239 = vstv %s238
    %240 = vst [vmem:[#allocation5] sm:$0xff] %v239
    // Predicated region
    $region18: #{tpu_custom_call.1} parent=1 // pred_check
      _
    $region19: #{tpu_custom_call.1} parent=1 // pred_check_branch
      %242 = sbr.rel (0) target = $region21
    $region20: #{tpu_custom_call.1} parent=1 // pred_region
      %s244 = ssub.s32 128, 128
      %245 = vsyncadd [#allocation6], %s244
      %s247 = sshll.u32 [#allocation5], 4
      %s248 = int_to_ptr.vmem [resolvable:$true] %s247
      %250 = dma.vmem_to_hbm [thread:$0]  %s248, 128, %s6, [#allocation6]
    $region21: #{tpu_custom_call.1} parent=1 // pred_fallthru
      _
    // Predicated region
    $region22: #{tpu_custom_call.1} parent=1 // pred_check
      _
    $region23: #{tpu_custom_call.1} parent=1 // pred_check_branch
      %252 = sbr.rel (0) target = $region25
    $region24: #{tpu_custom_call.1} parent=1 // pred_region
      %253 = dma.done [#allocation6], 128
    $region25: #{tpu_custom_call.1} parent=1 // pred_fallthru
      _
    %254 = vsyncpa [#allocation6], 1

</llo_original>
